<compile_context>
chip_gen: v7x
topology: tpu7x:2x2x1
jax: 0.10.0
libtpu: 0.0.40
codegen_flags: <defaults>
</compile_context>

<pallas_src>
import functools

import jax
import jax.numpy as jnp
from jax import lax
from jax.experimental import pallas as pl
from jax.experimental.pallas import tpu as pltpu


def _mlp_gate(pooled_sum, pooled_max, w1_ref, b1_ref, w2_ref, b2_ref,
              o_ref, hw):
    """Shared-MLP channel gate from the two pooled (tb, C) vectors."""
    avg = pooled_sum * (1.0 / hw)                                  # (tb, C)
    w1 = w1_ref[...]                                               # (hidden, C)
    b1 = b1_ref[...]                                               # (1, hidden)
    ha = lax.dot_general(avg, w1, (((1,), (1,)), ((), ())),
                         preferred_element_type=jnp.float32)       # (tb, hidden)
    hm = lax.dot_general(pooled_max, w1, (((1,), (1,)), ((), ())),
                         preferred_element_type=jnp.float32)       # (tb, hidden)
    h = jnp.maximum(ha + b1, 0.0) + jnp.maximum(hm + b1, 0.0)      # (tb, hidden)
    # Second (linear) layer applied once to the summed ReLU branches; each
    # branch would contribute +b2, hence the factor 2.  Exact equivalence to
    # mlp(avg) + mlp(max).
    att = jnp.dot(h, w2_ref[...], preferred_element_type=jnp.float32)
    att = att + 2.0 * b2_ref[...]                                  # (tb, C)
    o_ref[0] = jax.nn.sigmoid(att).astype(o_ref.dtype)


def channel_attn_kernel(x_ref, w1_ref, b1_ref, w2_ref, b2_ref, o_ref,
                        sacc_ref=None, macc_ref=None, *,
                        hw, fold, multi_chunk):
    # (tb, C, ths) chunk, read from HBM in its native dtype, upcast on-chip.
    xc = x_ref[...].astype(jnp.float32)
    ths = xc.shape[2]

    if fold:
        # Fold the 128-lane tiles element-wise on the VPU (static, lane-tile
        # aligned slices -> no relayout).  Only the final 128-wide partials
        # ever hit the cross-lane reduce tree.
        nt = ths // 128
        psum = xc[:, :, 0:128]
        pmax = psum
        for k in range(1, nt):
            sl = xc[:, :, k * 128:(k + 1) * 128]
            psum = psum + sl
            pmax = jnp.maximum(pmax, sl)
    else:
        psum = pmax = None   # ragged HW: single chunk, direct reduce below

    def finalize(ssum, smax):
        _mlp_gate(ssum, smax, w1_ref, b1_ref, w2_ref, b2_ref, o_ref, hw)

    if multi_chunk:
        s = pl.program_id(1)

        @pl.when(s == 0)
        def _():
            sacc_ref[...] = psum
            macc_ref[...] = pmax

        @pl.when(s != 0)
        def _():
            sacc_ref[...] = sacc_ref[...] + psum
            macc_ref[...] = jnp.maximum(macc_ref[...], pmax)

        @pl.when(s == pl.num_programs(1) - 1)
        def _():
            finalize(jnp.sum(sacc_ref[...], axis=2),
                     jnp.max(macc_ref[...], axis=2))
    else:
        if fold:
            finalize(jnp.sum(psum, axis=2), jnp.max(pmax, axis=2))
        else:
            finalize(jnp.sum(xc, axis=2), jnp.max(xc, axis=2))


_BLOCK_BUDGET = 4 * 1024 * 1024   # per input block (Pallas double-buffers it)
_MIN_BLOCK = 1 * 1024 * 1024


def _choose_tiles(B, C, HW, dtype_bytes):
    per_b = C * HW * dtype_bytes

    # Largest divisor of B whose (tb, C, HW) block fits the budget.
    tb = 1
    for d in range(1, B + 1):
        if B % d == 0 and d * per_b <= _BLOCK_BUDGET:
            tb = d
    # Split batch tiles (keeping blocks >= 1 MiB) until there are enough grid
    # steps to feed two TensorCores and pipeline the DMAs.
    while (B // tb) < 4 and tb % 2 == 0 and (tb // 2) * per_b >= _MIN_BLOCK:
        tb //= 2

    # Spatial chunking: only needed when a single batch element exceeds the
    # block budget.  Chunks must be lane-dense multiples of 128 that divide HW
    # exactly; otherwise fall back to one full-HW chunk (correct but with
    # masked lanes for ragged spatial sizes).
    if HW % 128 == 0:
        fold = True
        row_bytes = tb * C * dtype_bytes
        ths = None
        t = 128
        while t <= HW:
            if HW % t == 0 and t * row_bytes <= _BLOCK_BUDGET:
                ths = t
            t += 128
        if ths is None:
            ths = 128
    else:
        fold = False
        ths = HW
    return tb, ths, fold


def channel_attn(x, w1, b1, w2, b2):
    """x: (B, C, H, W).  w1: (C, hidden), b1: (hidden,), w2: (hidden, C),
    b2: (C,).  Returns the sigmoid gate broadcast to x.shape (matching the
    PyTorch module, which returns the expanded scale)."""
    B, C, H, W = x.shape
    HW = H * W
    hidden = w1.shape[1]
    dsize = jnp.dtype(x.dtype).itemsize

    tb, ths, fold = _choose_tiles(B, C, HW, dsize)
    nb = B // tb
    ns = (HW // ths) if fold else 1
    multi_chunk = ns > 1

    x3 = x.reshape(B, C, HW)                            # native dtype, no copy
    w1_t = jnp.transpose(w1).astype(jnp.float32)        # (hidden, C) lane-major
    w2_f = w2.astype(jnp.float32)                       # (hidden, C) lane-major
    b1_2d = b1.reshape(1, hidden).astype(jnp.float32)
    b2_2d = b2.reshape(1, C).astype(jnp.float32)        # C on lanes

    kernel = functools.partial(channel_attn_kernel,
                               hw=HW, fold=fold, multi_chunk=multi_chunk)

    scratch = []
    if multi_chunk:
        scratch = [pltpu.VMEM((tb, C, 128), jnp.float32),
                   pltpu.VMEM((tb, C, 128), jnp.float32)]

    scale = pl.pallas_call(
        kernel,
        out_shape=jax.ShapeDtypeStruct((nb, tb, C), x.dtype),
        grid_spec=pltpu.PrefetchScalarGridSpec(
            num_scalar_prefetch=0,
            grid=(nb, ns),
            in_specs=[
                pl.BlockSpec((tb, C, ths), lambda b, s: (b, 0, s)),
                pl.BlockSpec((hidden, C), lambda b, s: (0, 0)),
                pl.BlockSpec((1, hidden), lambda b, s: (0, 0)),
                pl.BlockSpec((hidden, C), lambda b, s: (0, 0)),
                pl.BlockSpec((1, C), lambda b, s: (0, 0)),
            ],
            out_specs=pl.BlockSpec((1, tb, C), lambda b, s: (b, 0, 0)),
            scratch_shapes=scratch,
        ),
        compiler_params=pltpu.CompilerParams(
            dimension_semantics=("parallel", "arbitrary"),
            vmem_limit_bytes=32 * 1024 * 1024),
    )(x3, w1_t, b1_2d, w2_f, b2_2d)

    scale = scale.reshape(B, C)
    # Lazy expand (fuses with any downstream consumer under jit); the kernel
    # itself never writes the redundant H*W-broadcast tensor to HBM.
    return jnp.broadcast_to(scale[:, :, None, None], (B, C, H, W))


def channel_attn_ref(x, w1, b1, w2, b2):
    """Pure-JAX reference mirroring the PyTorch forward."""
    B, C, H, W = x.shape
    xf = x.reshape(B, C, -1).astype(jnp.float32)
    avg = xf.mean(axis=-1)                 # (B, C)
    mx = xf.max(axis=-1)                   # (B, C)

    def mlp(p):
        return jnp.maximum(p @ w1 + b1, 0.0) @ w2 + b2

    att = mlp(avg) + mlp(mx)
    scale = jax.nn.sigmoid(att)            # (B, C)
    return jnp.broadcast_to(scale[:, :, None, None], x.shape)


if __name__ == "__main__":
    # module config: gate_channels=64, reduction_ration=16 -> hidden=4
    B, C, H, W = 2, 64, 16, 16
    reduction = 16
    hidden = C // reduction

    key = jax.random.PRNGKey(0)
    kx, kw1, kb1, kw2, kb2 = jax.random.split(key, 5)

    x = jax.random.normal(kx, (B, C, H, W), dtype=jnp.float32)

    # deterministic PyTorch-Linear-like init: U(-1/sqrt(fan_in), 1/sqrt(fan_in))
    bound1 = 1.0 / jnp.sqrt(jnp.float32(C))
    bound2 = 1.0 / jnp.sqrt(jnp.float32(hidden))
    w1 = jax.random.uniform(kw1, (C, hidden), jnp.float32, -bound1, bound1)
    b1 = jax.random.uniform(kb1, (hidden,), jnp.float32, -bound1, bound1)
    w2 = jax.random.uniform(kw2, (hidden, C), jnp.float32, -bound2, bound2)
    b2 = jax.random.uniform(kb2, (C,), jnp.float32, -bound2, bound2)

    out = channel_attn(x, w1, b1, w2, b2)
    out = jax.block_until_ready(out)

    ref = channel_attn_ref(x, w1, b1, w2, b2)
    assert out.shape == (B, C, H, W), out.shape
    assert jnp.allclose(out, ref, atol=1e-5, rtol=1e-5), (
        float(jnp.max(jnp.abs(out - ref))))
    print("KERNEL_OK")
</pallas_src>

<mosaic_0001>
module attributes {stable_mosaic.version = 11 : i64} {
  func.func @channel_attn_kernel(%arg0: i32, %arg1: i32, %arg2: memref<2x64x256xf32, #tpu.memory_space<vmem>>, %arg3: memref<4x64xf32, #tpu.memory_space<vmem>>, %arg4: memref<1x4xf32, #tpu.memory_space<vmem>>, %arg5: memref<4x64xf32, #tpu.memory_space<vmem>>, %arg6: memref<1x64xf32, #tpu.memory_space<vmem>>, %arg7: memref<1x2x64xf32, #tpu.memory_space<vmem>>) attributes {dimension_semantics = [#tpu.dimension_semantics<parallel>, #tpu.dimension_semantics<arbitrary>], iteration_bounds = array<i64: 1, 1>, scalar_prefetch = 0 : i64, scratch_operands = 0 : i64, tpu.core_type = #tpu.core_type<tc>, window_params = [{transform_indices = @transform_0, window_bounds = array<i64: 2, 64, 256>}, {pipeline_mode = #tpu.pipeline_mode<synchronous>, transform_indices = @transform_1, window_bounds = array<i64: 4, 64>}, {pipeline_mode = #tpu.pipeline_mode<synchronous>, transform_indices = @transform_2, window_bounds = array<i64: 1, 4>}, {pipeline_mode = #tpu.pipeline_mode<synchronous>, transform_indices = @transform_3, window_bounds = array<i64: 4, 64>}, {pipeline_mode = #tpu.pipeline_mode<synchronous>, transform_indices = @transform_4, window_bounds = array<i64: 1, 64>}, {transform_indices = @transform_5, window_bounds = array<i64: 1, 2, 64>}]} {
    %c0 = arith.constant 0 : index
    %c0_0 = arith.constant 0 : index
    %c0_1 = arith.constant 0 : index
    %0 = vector.load %arg2[%c0, %c0_0, %c0_1] : memref<2x64x256xf32, #tpu.memory_space<vmem>>, vector<2x64x256xf32>
    %1 = vector.extract_strided_slice %0 {offsets = [0, 0, 0], sizes = [2, 64, 128], strides = [1, 1, 1]} : vector<2x64x256xf32> to vector<2x64x128xf32>
    %2 = vector.extract_strided_slice %0 {offsets = [0, 0, 128], sizes = [2, 64, 128], strides = [1, 1, 1]} : vector<2x64x256xf32> to vector<2x64x128xf32>
    %3 = arith.addf %1, %2 : vector<2x64x128xf32>
    %4 = arith.maximumf %1, %2 : vector<2x64x128xf32>
    %cst = arith.constant dense<0.000000e+00> : vector<2x64xf32>
    %5 = vector.multi_reduction <add>, %3, %cst [2] : vector<2x64x128xf32> to vector<2x64xf32>
    %cst_2 = arith.constant dense<0xFF800000> : vector<2x64xf32>
    %6 = vector.multi_reduction <maximumf>, %4, %cst_2 [2] : vector<2x64x128xf32> to vector<2x64xf32>
    %cst_3 = arith.constant 3.906250e-03 : f32
    %7 = vector.broadcast %cst_3 : f32 to vector<2x64xf32>
    %8 = arith.mulf %5, %7 : vector<2x64xf32>
    %c0_4 = arith.constant 0 : index
    %c0_5 = arith.constant 0 : index
    %9 = vector.load %arg3[%c0_4, %c0_5] : memref<4x64xf32, #tpu.memory_space<vmem>>, vector<4x64xf32>
    %c0_6 = arith.constant 0 : index
    %c0_7 = arith.constant 0 : index
    %10 = vector.load %arg4[%c0_6, %c0_7] : memref<1x4xf32, #tpu.memory_space<vmem>>, vector<1x4xf32>
    %cst_8 = arith.constant dense<0.000000e+00> : vector<2x4xf32>
    %11 = tpu.matmul %8, %9, %cst_8 {dimension_numbers = #tpu.dot_dimension_numbers<[1], [1], [0], [0], [0, 0, 1, 0], [], []>} : vector<2x64xf32>, vector<4x64xf32>, vector<2x4xf32> -> vector<2x4xf32>
    %cst_9 = arith.constant dense<0.000000e+00> : vector<2x4xf32>
    %12 = tpu.matmul %6, %9, %cst_9 {dimension_numbers = #tpu.dot_dimension_numbers<[1], [1], [0], [0], [0, 0, 1, 0], [], []>} : vector<2x64xf32>, vector<4x64xf32>, vector<2x4xf32> -> vector<2x4xf32>
    %13 = vector.broadcast %10 : vector<1x4xf32> to vector<2x4xf32>
    %14 = arith.addf %11, %13 : vector<2x4xf32>
    %cst_10 = arith.constant 0.000000e+00 : f32
    %15 = vector.broadcast %cst_10 : f32 to vector<2x4xf32>
    %16 = arith.maximumf %14, %15 : vector<2x4xf32>
    %17 = vector.broadcast %10 : vector<1x4xf32> to vector<2x4xf32>
    %18 = arith.addf %12, %17 : vector<2x4xf32>
    %cst_11 = arith.constant 0.000000e+00 : f32
    %19 = vector.broadcast %cst_11 : f32 to vector<2x4xf32>
    %20 = arith.maximumf %18, %19 : vector<2x4xf32>
    %21 = arith.addf %16, %20 : vector<2x4xf32>
    %c0_12 = arith.constant 0 : index
    %c0_13 = arith.constant 0 : index
    %22 = vector.load %arg5[%c0_12, %c0_13] : memref<4x64xf32, #tpu.memory_space<vmem>>, vector<4x64xf32>
    %cst_14 = arith.constant dense<0.000000e+00> : vector<2x64xf32>
    %23 = tpu.matmul %21, %22, %cst_14 {dimension_numbers = #tpu.dot_dimension_numbers<[1], [0], [0], [1], [0, 0, 1, 1], [], []>} : vector<2x4xf32>, vector<4x64xf32>, vector<2x64xf32> -> vector<2x64xf32>
    %c0_15 = arith.constant 0 : index
    %c0_16 = arith.constant 0 : index
    %24 = vector.load %arg6[%c0_15, %c0_16] : memref<1x64xf32, #tpu.memory_space<vmem>>, vector<1x64xf32>
    %cst_17 = arith.constant 2.000000e+00 : f32
    %25 = vector.broadcast %cst_17 : f32 to vector<1x64xf32>
    %26 = arith.mulf %25, %24 : vector<1x64xf32>
    %27 = vector.broadcast %26 : vector<1x64xf32> to vector<2x64xf32>
    %28 = arith.addf %23, %27 : vector<2x64xf32>
    %29 = arith.negf %28 : vector<2x64xf32>
    %30 = math.exp %29 : vector<2x64xf32>
    %cst_18 = arith.constant 1.000000e+00 : f32
    %31 = vector.broadcast %cst_18 : f32 to vector<2x64xf32>
    %32 = arith.addf %31, %30 : vector<2x64xf32>
    %33 = arith.divf %31, %32 : vector<2x64xf32>
    %c0_19 = arith.constant 0 : index
    %c0_20 = arith.constant 0 : index
    %c0_21 = arith.constant 0 : index
    %34 = vector.load %arg7[%c0_19, %c0_20, %c0_21] : memref<1x2x64xf32, #tpu.memory_space<vmem>>, vector<1x2x64xf32>
    %35 = vector.shape_cast %34 : vector<1x2x64xf32> to vector<2x64xf32>
    %36 = vector.shape_cast %33 : vector<2x64xf32> to vector<1x2x64xf32>
    tpu.vector_store %arg7[%c0_19, %c0_20, %c0_21], %36 {strides = array<i32>} : memref<1x2x64xf32, #tpu.memory_space<vmem>>, vector<1x2x64xf32>,
    return
  }
  func.func @transform_0(%arg0: i32, %arg1: i32) -> (i32, i32, i32) {
    %c0_i32 = arith.constant 0 : i32
    %c0_i32_0 = arith.constant 0 : i32
    return %arg0, %c0_i32, %arg1 : i32, i32, i32
  }
  func.func @transform_1(%arg0: i32, %arg1: i32) -> (i32, i32) {
    %c0_i32 = arith.constant 0 : i32
    %c0_i32_0 = arith.constant 0 : i32
    %c0_i32_1 = arith.constant 0 : i32
    return %c0_i32, %c0_i32_0 : i32, i32
  }
  func.func @transform_2(%arg0: i32, %arg1: i32) -> (i32, i32) {
    %c0_i32 = arith.constant 0 : i32
    %c0_i32_0 = arith.constant 0 : i32
    %c0_i32_1 = arith.constant 0 : i32
    return %c0_i32, %c0_i32_0 : i32, i32
  }
  func.func @transform_3(%arg0: i32, %arg1: i32) -> (i32, i32) {
    %c0_i32 = arith.constant 0 : i32
    %c0_i32_0 = arith.constant 0 : i32
    %c0_i32_1 = arith.constant 0 : i32
    return %c0_i32, %c0_i32_0 : i32, i32
  }
  func.func @transform_4(%arg0: i32, %arg1: i32) -> (i32, i32) {
    %c0_i32 = arith.constant 0 : i32
    %c0_i32_0 = arith.constant 0 : i32
    %c0_i32_1 = arith.constant 0 : i32
    return %c0_i32, %c0_i32_0 : i32, i32
  }
  func.func @transform_5(%arg0: i32, %arg1: i32) -> (i32, i32, i32) {
    %c0_i32 = arith.constant 0 : i32
    %c0_i32_0 = arith.constant 0 : i32
    %c0_i32_1 = arith.constant 0 : i32
    return %arg0, %c0_i32, %c0_i32_0 : i32, i32, i32
  }
}

</mosaic_0001>

<llo_original>
// kernel: tpu_custom_call.1
$region0: #{tpu_custom_call.1}
  #allocation0 [shape = 'u32[]', space=smem, size = 0x4, offset = 0x4, fixed_abs, tag = 'smem constant byte address 0x4 - core index']
  #allocation1 [shape = 'u32[144,128]{1,0:T(1,128)}', space=vmem, size = 0x12000, scoped, tag = 'internal scratch']
  %s0 = inlined_call_operand.hbm [shape: f32[2,64,256], index: 0, kind: input, shape index: {}]
  %s1 = inlined_call_operand.hbm [shape: f32[4,64], index: 1, kind: input, shape index: {}]
  %s2 = inlined_call_operand.vmem [shape: f32[1,4], index: 2, kind: input, shape index: {}]
  %s3 = inlined_call_operand.vmem [shape: f32[4,64], index: 3, kind: input, shape index: {}]
  %s4 = inlined_call_operand.vmem [shape: f32[1,64], index: 4, kind: input, shape index: {}]
  %s5 = inlined_call_operand.hbm [shape: f32[1,2,64], index: 5, kind: output, shape index: {}]
  %s6 = sld [smem:[#allocation0]]
  $region38: #{tpu_custom_call.1} parent=0
    _
  %s8 = ssub.s32 1, %s6
  %s9 = scalar_select 0, %s8, %s6
  $region1: #{tpu_custom_call.1} parent=0
    #allocation2 [shape = 'u8[131072]{0}', space=vmem, size = 0x20000, scoped, tag = 'input window, operand 0, single buffered']
    #allocation3 [shape = 's32[1]{0}', space=sflag, size = 0x4, scoped, tag = 'scoped memory for tpu_custom_call.1']
    #allocation4 [shape = 's32[1]{0}', space=sflag, size = 0x4, scoped, tag = 'scoped memory for tpu_custom_call.1']
    #allocation5 [shape = 'u8[2048]{0}', space=vmem, size = 0x800, scoped, tag = 'input window, operand 1, single buffered']
    #allocation6 [shape = 's32[1]{0}', space=sflag, size = 0x4, scoped, tag = 'scoped memory for tpu_custom_call.1']
    #allocation7 [shape = 'u8[1024]{0}', space=vmem, size = 0x400, scoped, tag = 'output window, operand 0, single buffered']
    %10 = vsyncpa [#allocation3], 0
    %11 = vsyncpa [#allocation6], 0
    %12 = vsyncpa [#allocation4], 0
    // Predicated region
    $region2: #{tpu_custom_call.1} parent=1 // pred_check
      _
    $region3: #{tpu_custom_call.1} parent=1 // pred_check_branch
      %14 = sbr.rel (0) target = $region5
    $region4: #{tpu_custom_call.1} parent=1 // pred_region
      %s16 = ssub.s32 4096, 4096
      %17 = vsyncadd [#allocation3], %s16
      %s18 = sshll.u32 [#allocation2], 4
      %s19 = int_to_ptr.vmem [resolvable:$true] %s18
      %24 = dma.hbm_to_vmem [thread:$0]  %s0, 4096, %s19, [#allocation3], 256, 256, 16
    $region5: #{tpu_custom_call.1} parent=1 // pred_fallthru
      _
    // Predicated region
    $region6: #{tpu_custom_call.1} parent=1 // pred_check
      _
    $region7: #{tpu_custom_call.1} parent=1 // pred_check_branch
      %26 = sbr.rel (0) target = $region9
    $region8: #{tpu_custom_call.1} parent=1 // pred_region
      %s28 = ssub.s32 64, 64
      %29 = vsyncadd [#allocation6], %s28
      %s31 = sshll.u32 [#allocation5], 4
      %s32 = int_to_ptr.vmem [resolvable:$true] %s31
      %34 = dma.hbm_to_vmem [thread:$0]  %s1, 64, %s32, [#allocation6]
    $region9: #{tpu_custom_call.1} parent=1 // pred_fallthru
      _
    // Predicated region
    $region10: #{tpu_custom_call.1} parent=1 // pred_check
      _
    $region11: #{tpu_custom_call.1} parent=1 // pred_check_branch
      %36 = sbr.rel (0) target = $region13
    $region12: #{tpu_custom_call.1} parent=1 // pred_region
      _
    $region13: #{tpu_custom_call.1} parent=1 // pred_fallthru
      _
    // Predicated region
    $region14: #{tpu_custom_call.1} parent=1 // pred_check
      _
    $region15: #{tpu_custom_call.1} parent=1 // pred_check_branch
      %38 = sbr.rel (0) target = $region17
    $region16: #{tpu_custom_call.1} parent=1 // pred_region
      _
    $region17: #{tpu_custom_call.1} parent=1 // pred_fallthru
      _
    // Predicated region
    $region18: #{tpu_custom_call.1} parent=1 // pred_check
      _
    $region19: #{tpu_custom_call.1} parent=1 // pred_check_branch
      %40 = sbr.rel (0) target = $region21
    $region20: #{tpu_custom_call.1} parent=1 // pred_region
      _
    $region21: #{tpu_custom_call.1} parent=1 // pred_fallthru
      _
    // Predicated region
    $region22: #{tpu_custom_call.1} parent=1 // pred_check
      _
    $region23: #{tpu_custom_call.1} parent=1 // pred_check_branch
      %42 = sbr.rel (0) target = $region25
    $region24: #{tpu_custom_call.1} parent=1 // pred_region
      %43 = dma.done [#allocation3], 4096
    $region25: #{tpu_custom_call.1} parent=1 // pred_fallthru
      _
    // Predicated region
    $region26: #{tpu_custom_call.1} parent=1 // pred_check
      _
    $region27: #{tpu_custom_call.1} parent=1 // pred_check_branch
      %45 = sbr.rel (0) target = $region29
    $region28: #{tpu_custom_call.1} parent=1 // pred_region
      %46 = dma.done [#allocation6], 64
    $region29: #{tpu_custom_call.1} parent=1 // pred_fallthru
      _
    %v47 = vld [vmem:[#allocation2] sm:$0xff]
    %v48 = vld [vmem:[#allocation2 + $0x8] sm:$0xff]
    %v49 = vld [vmem:[#allocation2 + $0x10] sm:$0xff]
    %v50 = vld [vmem:[#allocation2 + $0x18] sm:$0xff]
    %v51 = vld [vmem:[#allocation2 + $0x20] sm:$0xff]
    %v52 = vld [vmem:[#allocation2 + $0x28] sm:$0xff]
    %v53 = vld [vmem:[#allocation2 + $0x30] sm:$0xff]
    %v54 = vld [vmem:[#allocation2 + $0x38] sm:$0xff]
    %v55 = vld [vmem:[#allocation2 + $0x40] sm:$0xff]
    %v56 = vld [vmem:[#allocation2 + $0x48] sm:$0xff]
    %v57 = vld [vmem:[#allocation2 + $0x50] sm:$0xff]
    %v58 = vld [vmem:[#allocation2 + $0x58] sm:$0xff]
    %v59 = vld [vmem:[#allocation2 + $0x60] sm:$0xff]
    %v60 = vld [vmem:[#allocation2 + $0x68] sm:$0xff]
    %v61 = vld [vmem:[#allocation2 + $0x70] sm:$0xff]
    %v62 = vld [vmem:[#allocation2 + $0x78] sm:$0xff]
    %v63 = vld [vmem:[#allocation2 + $0x80] sm:$0xff]
    %v64 = vld [vmem:[#allocation2 + $0x88] sm:$0xff]
    %v65 = vld [vmem:[#allocation2 + $0x90] sm:$0xff]
    %v66 = vld [vmem:[#allocation2 + $0x98] sm:$0xff]
    %v67 = vld [vmem:[#allocation2 + $0xa0] sm:$0xff]
    %v68 = vld [vmem:[#allocation2 + $0xa8] sm:$0xff]
    %v69 = vld [vmem:[#allocation2 + $0xb0] sm:$0xff]
    %v70 = vld [vmem:[#allocation2 + $0xb8] sm:$0xff]
    %v71 = vld [vmem:[#allocation2 + $0xc0] sm:$0xff]
    %v72 = vld [vmem:[#allocation2 + $0xc8] sm:$0xff]
    %v73 = vld [vmem:[#allocation2 + $0xd0] sm:$0xff]
    %v74 = vld [vmem:[#allocation2 + $0xd8] sm:$0xff]
    %v75 = vld [vmem:[#allocation2 + $0xe0] sm:$0xff]
    %v76 = vld [vmem:[#allocation2 + $0xe8] sm:$0xff]
    %v77 = vld [vmem:[#allocation2 + $0xf0] sm:$0xff]
    %v78 = vld [vmem:[#allocation2 + $0xf8] sm:$0xff]
    %v79 = vadd.f32 %v47, %v48
    %v80 = vadd.f32 %v49, %v50
    %v81 = vadd.f32 %v51, %v52
    %v82 = vadd.f32 %v53, %v54
    %v83 = vadd.f32 %v55, %v56
    %v84 = vadd.f32 %v57, %v58
    %v85 = vadd.f32 %v59, %v60
    %v86 = vadd.f32 %v61, %v62
    %v87 = vadd.f32 %v63, %v64
    %v88 = vadd.f32 %v65, %v66
    %v89 = vadd.f32 %v67, %v68
    %v90 = vadd.f32 %v69, %v70
    %v91 = vadd.f32 %v71, %v72
    %v92 = vadd.f32 %v73, %v74
    %v93 = vadd.f32 %v75, %v76
    %v94 = vadd.f32 %v77, %v78
    %v95 = vmax.f32 %v47, %v48
    %v96 = vmax.f32 %v49, %v50
    %v97 = vmax.f32 %v51, %v52
    %v98 = vmax.f32 %v53, %v54
    %v99 = vmax.f32 %v55, %v56
    %v100 = vmax.f32 %v57, %v58
    %v101 = vmax.f32 %v59, %v60
    %v102 = vmax.f32 %v61, %v62
    %v103 = vmax.f32 %v63, %v64
    %v104 = vmax.f32 %v65, %v66
    %v105 = vmax.f32 %v67, %v68
    %v106 = vmax.f32 %v69, %v70
    %v107 = vmax.f32 %v71, %v72
    %v108 = vmax.f32 %v73, %v74
    %v109 = vmax.f32 %v75, %v76
    %v110 = vmax.f32 %v77, %v78
    %111 = vadd.xlane.f32.xlu0 %v79
    %v112 = vpop.xlane.xlu0 %111
    %113 = vadd.xlane.f32.xlu0 %v80
    %v114 = vpop.xlane.xlu0 %113
    %115 = vadd.xlane.f32.xlu0 %v81
    %v116 = vpop.xlane.xlu0 %115
    %117 = vadd.xlane.f32.xlu0 %v82
    %v118 = vpop.xlane.xlu0 %117
    %119 = vadd.xlane.f32.xlu0 %v83
    %v120 = vpop.xlane.xlu0 %119
    %121 = vadd.xlane.f32.xlu0 %v84
    %v122 = vpop.xlane.xlu0 %121
    %123 = vadd.xlane.f32.xlu0 %v85
    %v124 = vpop.xlane.xlu0 %123
    %125 = vadd.xlane.f32.xlu0 %v86
    %v126 = vpop.xlane.xlu0 %125
    %127 = vadd.xlane.f32.xlu0 %v87
    %v128 = vpop.xlane.xlu0 %127
    %129 = vadd.xlane.f32.xlu0 %v88
    %v130 = vpop.xlane.xlu0 %129
    %131 = vadd.xlane.f32.xlu0 %v89
    %v132 = vpop.xlane.xlu0 %131
    %133 = vadd.xlane.f32.xlu0 %v90
    %v134 = vpop.xlane.xlu0 %133
    %135 = vadd.xlane.f32.xlu0 %v91
    %v136 = vpop.xlane.xlu0 %135
    %137 = vadd.xlane.f32.xlu0 %v92
    %v138 = vpop.xlane.xlu0 %137
    %139 = vadd.xlane.f32.xlu0 %v93
    %v140 = vpop.xlane.xlu0 %139
    %141 = vadd.xlane.f32.xlu0 %v94
    %v142 = vpop.xlane.xlu0 %141
    %143 = vmax.xlane.f32.xlu0 %v95
    %v144 = vpop.xlane.xlu0 %143
    %145 = vmax.xlane.f32.xlu0 %v96
    %v146 = vpop.xlane.xlu0 %145
    %147 = vmax.xlane.f32.xlu0 %v97
    %v148 = vpop.xlane.xlu0 %147
    %149 = vmax.xlane.f32.xlu0 %v98
    %v150 = vpop.xlane.xlu0 %149
    %151 = vmax.xlane.f32.xlu0 %v99
    %v152 = vpop.xlane.xlu0 %151
    %153 = vmax.xlane.f32.xlu0 %v100
    %v154 = vpop.xlane.xlu0 %153
    %155 = vmax.xlane.f32.xlu0 %v101
    %v156 = vpop.xlane.xlu0 %155
    %157 = vmax.xlane.f32.xlu0 %v102
    %v158 = vpop.xlane.xlu0 %157
    %159 = vmax.xlane.f32.xlu0 %v103
    %v160 = vpop.xlane.xlu0 %159
    %161 = vmax.xlane.f32.xlu0 %v104
    %v162 = vpop.xlane.xlu0 %161
    %163 = vmax.xlane.f32.xlu0 %v105
    %v164 = vpop.xlane.xlu0 %163
    %165 = vmax.xlane.f32.xlu0 %v106
    %v166 = vpop.xlane.xlu0 %165
    %167 = vmax.xlane.f32.xlu0 %v107
    %v168 = vpop.xlane.xlu0 %167
    %169 = vmax.xlane.f32.xlu0 %v108
    %v170 = vpop.xlane.xlu0 %169
    %171 = vmax.xlane.f32.xlu0 %v109
    %v172 = vpop.xlane.xlu0 %171
    %173 = vmax.xlane.f32.xlu0 %v110
    %v174 = vpop.xlane.xlu0 %173
    %v175 = vmul.f32 %v112, 0.00390625
    %v176 = vmul.f32 %v114, 0.00390625
    %v177 = vmul.f32 %v116, 0.00390625
    %v178 = vmul.f32 %v118, 0.00390625
    %v179 = vmul.f32 %v120, 0.00390625
    %v180 = vmul.f32 %v122, 0.00390625
    %v181 = vmul.f32 %v124, 0.00390625
    %v182 = vmul.f32 %v126, 0.00390625
    %v183 = vmul.f32 %v128, 0.00390625
    %v184 = vmul.f32 %v130, 0.00390625
    %v185 = vmul.f32 %v132, 0.00390625
    %v186 = vmul.f32 %v134, 0.00390625
    %v187 = vmul.f32 %v136, 0.00390625
    %v188 = vmul.f32 %v138, 0.00390625
    %v189 = vmul.f32 %v140, 0.00390625
    %v190 = vmul.f32 %v142, 0.00390625
    %v191 = vld [vmem:[#allocation5] sm:$0xf]
    %v192 = vld [vmem:[%s2] sm:$0x1]
    %v194 = vlaneseq
    %v195 = vshrl.u32 %v194, 7
    %v196 = vsub.s32 0, %v195
    %v197 = vrot.slane %v192, %v196
    %v215 = vlaneseq
    %v216 = vand.u32 %v215, 127
    %v217 = vlaneseq
    %v218 = vshrl.u32 %v217, 7
    %v219 = vsub.s32 %v216, %v218
    %v220 = vrot.slane %v175, %v219
    %v221 = vadd.s32 %v216, 4294967288
    %v222 = vlaneseq
    %v223 = vshrl.u32 %v222, 7
    %v224 = vsub.s32 %v221, %v223
    %v225 = vrot.slane %v176, %v224
    %vm226 = vcmask 130112
    %v227 = vsel %vm226, %v225, %v220
    %v228 = vadd.s32 %v216, 4294967280
    %v229 = vlaneseq
    %v230 = vshrl.u32 %v229, 7
    %v231 = vsub.s32 %v228, %v230
    %v232 = vrot.slane %v177, %v231
    %vm233 = vcmask 195712
    %v234 = vsel %vm233, %v232, %v227
    %v235 = vadd.s32 %v216, 4294967272
    %v236 = vlaneseq
    %v237 = vshrl.u32 %v236, 7
    %v238 = vsub.s32 %v235, %v237
    %v239 = vrot.slane %v178, %v238
    %vm240 = vcmask 261312
    %v241 = vsel %vm240, %v239, %v234
    %v242 = vadd.s32 %v216, 4294967264
    %v243 = vlaneseq
    %v244 = vshrl.u32 %v243, 7
    %v245 = vsub.s32 %v242, %v244
    %v246 = vrot.slane %v179, %v245
    %vm247 = vcmask 326912
    %v248 = vsel %vm247, %v246, %v241
    %v249 = vadd.s32 %v216, 4294967256
    %v250 = vlaneseq
    %v251 = vshrl.u32 %v250, 7
    %v252 = vsub.s32 %v249, %v251
    %v253 = vrot.slane %v180, %v252
    %vm254 = vcmask 392512
    %v255 = vsel %vm254, %v253, %v248
    %v256 = vadd.s32 %v216, 4294967248
    %v257 = vlaneseq
    %v258 = vshrl.u32 %v257, 7
    %v259 = vsub.s32 %v256, %v258
    %v260 = vrot.slane %v181, %v259
    %vm261 = vcmask 458112
    %v262 = vsel %vm261, %v260, %v255
    %v263 = vadd.s32 %v216, 4294967240
    %v264 = vlaneseq
    %v265 = vshrl.u32 %v264, 7
    %v266 = vsub.s32 %v263, %v265
    %v267 = vrot.slane %v182, %v266
    %vm268 = vcmask 523712
    %v269 = vsel %vm268, %v267, %v262
    %v270 = vlaneseq
    %v271 = vshrl.u32 %v270, 7
    %v272 = vsub.s32 %v216, %v271
    %v273 = vrot.slane %v183, %v272
    %v274 = vlaneseq
    %v275 = vshrl.u32 %v274, 7
    %v276 = vsub.s32 %v221, %v275
    %v277 = vrot.slane %v184, %v276
    %v278 = vsel %vm226, %v277, %v273
    %v279 = vlaneseq
    %v280 = vshrl.u32 %v279, 7
    %v281 = vsub.s32 %v228, %v280
    %v282 = vrot.slane %v185, %v281
    %v283 = vsel %vm233, %v282, %v278
    %v284 = vlaneseq
    %v285 = vshrl.u32 %v284, 7
    %v286 = vsub.s32 %v235, %v285
    %v287 = vrot.slane %v186, %v286
    %v288 = vsel %vm240, %v287, %v283
    %v289 = vlaneseq
    %v290 = vshrl.u32 %v289, 7
    %v291 = vsub.s32 %v242, %v290
    %v292 = vrot.slane %v187, %v291
    %v293 = vsel %vm247, %v292, %v288
    %v294 = vlaneseq
    %v295 = vshrl.u32 %v294, 7
    %v296 = vsub.s32 %v249, %v295
    %v297 = vrot.slane %v188, %v296
    %v298 = vsel %vm254, %v297, %v293
    %v299 = vlaneseq
    %v300 = vshrl.u32 %v299, 7
    %v301 = vsub.s32 %v256, %v300
    %v302 = vrot.slane %v189, %v301
    %v303 = vsel %vm261, %v302, %v298
    %v304 = vlaneseq
    %v305 = vshrl.u32 %v304, 7
    %v306 = vsub.s32 %v263, %v305
    %v307 = vrot.slane %v190, %v306
    %v308 = vsel %vm268, %v307, %v303
    %vm309 = vcmask 1041409
    %v310 = vsel %vm309, %v308, %v269
    %vm311 = vcmask 523264
    %v312 = vsel %vm311, %v310, 0
    %v315 = vsel %vm311, %v191, 0
    %317 = vmatprep.subr.mxu0 0.0
    %318 = vmatpush1.xpose.msra.mxu0 %v315
    %319 = vmatprep.subr.mxu0 0.0
    %320 = vmatpush1.xpose.msra.mxu0 0.0
    %321 = vmatprep.subr.mxu0 0.0
    %322 = vmatpush1.xpose.msra.mxu0 0.0
    %323 = vmatprep.subr.mxu0 0.0
    %324 = vmatpush1.xpose.msra.mxu0 0.0
    %325 = vmatprep.subr.mxu0 0.0
    %326 = vmatpush1.xpose.msra.mxu0 0.0
    %327 = vmatprep.subr.mxu0 0.0
    %328 = vmatpush1.xpose.msra.mxu0 0.0
    %329 = vmatprep.subr.mxu0 0.0
    %330 = vmatpush1.xpose.msra.mxu0 0.0
    %331 = vmatprep.subr.mxu0 0.0
    %332 = vmatpush1.xpose.msra.mxu0 0.0
    %333 = vmatprep.subr.mxu0 0.0
    %334 = vmatpush1.xpose.msra.mxu0 0.0
    %335 = vmatprep.subr.mxu0 0.0
    %336 = vmatpush1.xpose.msra.mxu0 0.0
    %337 = vmatprep.subr.mxu0 0.0
    %338 = vmatpush1.xpose.msra.mxu0 0.0
    %339 = vmatprep.subr.mxu0 0.0
    %340 = vmatpush1.xpose.msra.mxu0 0.0
    %341 = vmatprep.subr.mxu0 0.0
    %342 = vmatpush1.xpose.msra.mxu0 0.0
    %343 = vmatprep.subr.mxu0 0.0
    %344 = vmatpush1.xpose.msra.mxu0 0.0
    %345 = vmatprep.subr.mxu0 0.0
    %346 = vmatpush1.xpose.msra.mxu0 0.0
    %347 = vmatprep.subr.mxu0 0.0
    %348 = vmatpush1.xpose.msra.mxu0 0.0
    %349 = vmatprep.subr.mxu0 0.0
    %350 = vmatpush1.xpose.msra.mxu0 0.0
    %351 = vmatprep.subr.mxu0 0.0
    %352 = vmatpush1.xpose.msra.mxu0 0.0
    %353 = vmatprep.subr.mxu0 0.0
    %354 = vmatpush1.xpose.msra.mxu0 0.0
    %355 = vmatprep.subr.mxu0 0.0
    %356 = vmatpush1.xpose.msra.mxu0 0.0
    %357 = vmatprep.subr.mxu0 0.0
    %358 = vmatpush1.xpose.msra.mxu0 0.0
    %359 = vmatprep.subr.mxu0 0.0
    %360 = vmatpush1.xpose.msra.mxu0 0.0
    %361 = vmatprep.subr.mxu0 0.0
    %362 = vmatpush1.xpose.msra.mxu0 0.0
    %363 = vmatprep.subr.mxu0 0.0
    %364 = vmatpush1.xpose.msra.mxu0 0.0
    %365 = vmatprep.subr.mxu0 0.0
    %366 = vmatpush1.xpose.msra.mxu0 0.0
    %367 = vmatprep.subr.mxu0 0.0
    %368 = vmatpush1.xpose.msra.mxu0 0.0
    %369 = vmatprep.subr.mxu0 0.0
    %370 = vmatpush1.xpose.msra.mxu0 0.0
    %371 = vmatprep.subr.mxu0 0.0
    %372 = vmatpush1.xpose.msra.mxu0 0.0
    %373 = vmatprep.subr.mxu0 0.0
    %374 = vmatpush1.xpose.msra.mxu0 0.0
    %375 = vmatprep.subr.mxu0 0.0
    %376 = vmatpush1.xpose.msra.mxu0 0.0
    %377 = vmatprep.subr.mxu0 0.0
    %378 = vmatpush1.xpose.msra.mxu0 0.0
    %379 = vmatprep.subr.mxu0 0.0
    %380 = vmatpush1.xpose.msra.mxu0 0.0
    %381 = vmatprep.mubr.f32.mxu0 0.0
    %382 = vmatmul.mubr.f32.gmra.mrb[0].mxu0 %v312
    %v383 = vpop.f32.mrb[0].mxu0
    %v384 = vadd.f32 %v197, %v383
    %v385 = vpop.f32.mrb[0].mxu0
    %386 = vdwg.mxu0
    %v387 = vmax.f32 %v384, 0.0
    %v404 = vlaneseq
    %v405 = vshrl.u32 %v404, 7
    %v406 = vsub.s32 %v216, %v405
    %v407 = vrot.slane %v144, %v406
    %v408 = vlaneseq
    %v409 = vshrl.u32 %v408, 7
    %v410 = vsub.s32 %v221, %v409
    %v411 = vrot.slane %v146, %v410
    %v412 = vsel %vm226, %v411, %v407
    %v413 = vlaneseq
    %v414 = vshrl.u32 %v413, 7
    %v415 = vsub.s32 %v228, %v414
    %v416 = vrot.slane %v148, %v415
    %v417 = vsel %vm233, %v416, %v412
    %v418 = vlaneseq
    %v419 = vshrl.u32 %v418, 7
    %v420 = vsub.s32 %v235, %v419
    %v421 = vrot.slane %v150, %v420
    %v422 = vsel %vm240, %v421, %v417
    %v423 = vlaneseq
    %v424 = vshrl.u32 %v423, 7
    %v425 = vsub.s32 %v242, %v424
    %v426 = vrot.slane %v152, %v425
    %v427 = vsel %vm247, %v426, %v422
    %v428 = vlaneseq
    %v429 = vshrl.u32 %v428, 7
    %v430 = vsub.s32 %v249, %v429
    %v431 = vrot.slane %v154, %v430
    %v432 = vsel %vm254, %v431, %v427
    %v433 = vlaneseq
    %v434 = vshrl.u32 %v433, 7
    %v435 = vsub.s32 %v256, %v434
    %v436 = vrot.slane %v156, %v435
    %v437 = vsel %vm261, %v436, %v432
    %v438 = vlaneseq
    %v439 = vshrl.u32 %v438, 7
    %v440 = vsub.s32 %v263, %v439
    %v441 = vrot.slane %v158, %v440
    %v442 = vsel %vm268, %v441, %v437
    %v443 = vlaneseq
    %v444 = vshrl.u32 %v443, 7
    %v445 = vsub.s32 %v216, %v444
    %v446 = vrot.slane %v160, %v445
    %v447 = vlaneseq
    %v448 = vshrl.u32 %v447, 7
    %v449 = vsub.s32 %v221, %v448
    %v450 = vrot.slane %v162, %v449
    %v451 = vsel %vm226, %v450, %v446
    %v452 = vlaneseq
    %v453 = vshrl.u32 %v452, 7
    %v454 = vsub.s32 %v228, %v453
    %v455 = vrot.slane %v164, %v454
    %v456 = vsel %vm233, %v455, %v451
    %v457 = vlaneseq
    %v458 = vshrl.u32 %v457, 7
    %v459 = vsub.s32 %v235, %v458
    %v460 = vrot.slane %v166, %v459
    %v461 = vsel %vm240, %v460, %v456
    %v462 = vlaneseq
    %v463 = vshrl.u32 %v462, 7
    %v464 = vsub.s32 %v242, %v463
    %v465 = vrot.slane %v168, %v464
    %v466 = vsel %vm247, %v465, %v461
    %v467 = vlaneseq
    %v468 = vshrl.u32 %v467, 7
    %v469 = vsub.s32 %v249, %v468
    %v470 = vrot.slane %v170, %v469
    %v471 = vsel %vm254, %v470, %v466
    %v472 = vlaneseq
    %v473 = vshrl.u32 %v472, 7
    %v474 = vsub.s32 %v256, %v473
    %v475 = vrot.slane %v172, %v474
    %v476 = vsel %vm261, %v475, %v471
    %v477 = vlaneseq
    %v478 = vshrl.u32 %v477, 7
    %v479 = vsub.s32 %v263, %v478
    %v480 = vrot.slane %v174, %v479
    %v481 = vsel %vm268, %v480, %v476
    %v482 = vsel %vm309, %v481, %v442
    %v483 = vsel %vm311, %v482, 0
    %485 = vmatprep.subr.mxu0 0.0
    %486 = vmatpush1.xpose.msra.mxu0 %v315
    %487 = vmatprep.subr.mxu0 0.0
    %488 = vmatpush1.xpose.msra.mxu0 0.0
    %489 = vmatprep.subr.mxu0 0.0
    %490 = vmatpush1.xpose.msra.mxu0 0.0
    %491 = vmatprep.subr.mxu0 0.0
    %492 = vmatpush1.xpose.msra.mxu0 0.0
    %493 = vmatprep.subr.mxu0 0.0
    %494 = vmatpush1.xpose.msra.mxu0 0.0
    %495 = vmatprep.subr.mxu0 0.0
    %496 = vmatpush1.xpose.msra.mxu0 0.0
    %497 = vmatprep.subr.mxu0 0.0
    %498 = vmatpush1.xpose.msra.mxu0 0.0
    %499 = vmatprep.subr.mxu0 0.0
    %500 = vmatpush1.xpose.msra.mxu0 0.0
    %501 = vmatprep.subr.mxu0 0.0
    %502 = vmatpush1.xpose.msra.mxu0 0.0
    %503 = vmatprep.subr.mxu0 0.0
    %504 = vmatpush1.xpose.msra.mxu0 0.0
    %505 = vmatprep.subr.mxu0 0.0
    %506 = vmatpush1.xpose.msra.mxu0 0.0
    %507 = vmatprep.subr.mxu0 0.0
    %508 = vmatpush1.xpose.msra.mxu0 0.0
    %509 = vmatprep.subr.mxu0 0.0
    %510 = vmatpush1.xpose.msra.mxu0 0.0
    %511 = vmatprep.subr.mxu0 0.0
    %512 = vmatpush1.xpose.msra.mxu0 0.0
    %513 = vmatprep.subr.mxu0 0.0
    %514 = vmatpush1.xpose.msra.mxu0 0.0
    %515 = vmatprep.subr.mxu0 0.0
    %516 = vmatpush1.xpose.msra.mxu0 0.0
    %517 = vmatprep.subr.mxu0 0.0
    %518 = vmatpush1.xpose.msra.mxu0 0.0
    %519 = vmatprep.subr.mxu0 0.0
    %520 = vmatpush1.xpose.msra.mxu0 0.0
    %521 = vmatprep.subr.mxu0 0.0
    %522 = vmatpush1.xpose.msra.mxu0 0.0
    %523 = vmatprep.subr.mxu0 0.0
    %524 = vmatpush1.xpose.msra.mxu0 0.0
    %525 = vmatprep.subr.mxu0 0.0
    %526 = vmatpush1.xpose.msra.mxu0 0.0
    %527 = vmatprep.subr.mxu0 0.0
    %528 = vmatpush1.xpose.msra.mxu0 0.0
    %529 = vmatprep.subr.mxu0 0.0
    %530 = vmatpush1.xpose.msra.mxu0 0.0
    %531 = vmatprep.subr.mxu0 0.0
    %532 = vmatpush1.xpose.msra.mxu0 0.0
    %533 = vmatprep.subr.mxu0 0.0
    %534 = vmatpush1.xpose.msra.mxu0 0.0
    %535 = vmatprep.subr.mxu0 0.0
    %536 = vmatpush1.xpose.msra.mxu0 0.0
    %537 = vmatprep.subr.mxu0 0.0
    %538 = vmatpush1.xpose.msra.mxu0 0.0
    %539 = vmatprep.subr.mxu0 0.0
    %540 = vmatpush1.xpose.msra.mxu0 0.0
    %541 = vmatprep.subr.mxu0 0.0
    %542 = vmatpush1.xpose.msra.mxu0 0.0
    %543 = vmatprep.subr.mxu0 0.0
    %544 = vmatpush1.xpose.msra.mxu0 0.0
    %545 = vmatprep.subr.mxu0 0.0
    %546 = vmatpush1.xpose.msra.mxu0 0.0
    %547 = vmatprep.subr.mxu0 0.0
    %548 = vmatpush1.xpose.msra.mxu0 0.0
    %549 = vmatprep.mubr.f32.mxu0 0.0
    %550 = vmatmul.mubr.f32.gmra.mrb[0].mxu0 %v483
    %v551 = vpop.f32.mrb[0].mxu0
    %v552 = vadd.f32 %v197, %v551
    %v553 = vpop.f32.mrb[0].mxu0
    %554 = vdwg.mxu0
    %v555 = vmax.f32 %v552, 0.0
    %v556 = vadd.f32 %v387, %v555
    %v557 = vld [vmem:[%s3] sm:$0xf]
    %v558 = vld [vmem:[%s4] sm:$0x1]
    %v559 = vmul.f32 %v558, 2.0
    %v561 = vlaneseq
    %v562 = vshrl.u32 %v561, 7
    %v563 = vsub.s32 0, %v562
    %v564 = vrot.slane %v559, %v563
    %vm566 = vcmask 31744
    %v568 = vsel %vm566, %v556, 0
    %vm570 = vcmask 1043456
    %v572 = vsel %vm570, %v557, 0
    %574 = vmatprep.subr.mxu0 0.0
    %575 = vmatpush1.msra.mxu0 %v572
    %576 = vmatprep.subr.mxu0 0.0
    %577 = vmatpush1.msra.mxu0 0.0
    %578 = vmatprep.subr.mxu0 0.0
    %579 = vmatpush1.msra.mxu0 0.0
    %580 = vmatprep.subr.mxu0 0.0
    %581 = vmatpush1.msra.mxu0 0.0
    %582 = vmatprep.subr.mxu0 0.0
    %583 = vmatpush1.msra.mxu0 0.0
    %584 = vmatprep.subr.mxu0 0.0
    %585 = vmatpush1.msra.mxu0 0.0
    %586 = vmatprep.subr.mxu0 0.0
    %587 = vmatpush1.msra.mxu0 0.0
    %588 = vmatprep.subr.mxu0 0.0
    %589 = vmatpush1.msra.mxu0 0.0
    %590 = vmatprep.subr.mxu0 0.0
    %591 = vmatpush1.msra.mxu0 0.0
    %592 = vmatprep.subr.mxu0 0.0
    %593 = vmatpush1.msra.mxu0 0.0
    %594 = vmatprep.subr.mxu0 0.0
    %595 = vmatpush1.msra.mxu0 0.0
    %596 = vmatprep.subr.mxu0 0.0
    %597 = vmatpush1.msra.mxu0 0.0
    %598 = vmatprep.subr.mxu0 0.0
    %599 = vmatpush1.msra.mxu0 0.0
    %600 = vmatprep.subr.mxu0 0.0
    %601 = vmatpush1.msra.mxu0 0.0
    %602 = vmatprep.subr.mxu0 0.0
    %603 = vmatpush1.msra.mxu0 0.0
    %604 = vmatprep.subr.mxu0 0.0
    %605 = vmatpush1.msra.mxu0 0.0
    %606 = vmatprep.subr.mxu0 0.0
    %607 = vmatpush1.msra.mxu0 0.0
    %608 = vmatprep.subr.mxu0 0.0
    %609 = vmatpush1.msra.mxu0 0.0
    %610 = vmatprep.subr.mxu0 0.0
    %611 = vmatpush1.msra.mxu0 0.0
    %612 = vmatprep.subr.mxu0 0.0
    %613 = vmatpush1.msra.mxu0 0.0
    %614 = vmatprep.subr.mxu0 0.0
    %615 = vmatpush1.msra.mxu0 0.0
    %616 = vmatprep.subr.mxu0 0.0
    %617 = vmatpush1.msra.mxu0 0.0
    %618 = vmatprep.subr.mxu0 0.0
    %619 = vmatpush1.msra.mxu0 0.0
    %620 = vmatprep.subr.mxu0 0.0
    %621 = vmatpush1.msra.mxu0 0.0
    %622 = vmatprep.subr.mxu0 0.0
    %623 = vmatpush1.msra.mxu0 0.0
    %624 = vmatprep.subr.mxu0 0.0
    %625 = vmatpush1.msra.mxu0 0.0
    %626 = vmatprep.subr.mxu0 0.0
    %627 = vmatpush1.msra.mxu0 0.0
    %628 = vmatprep.subr.mxu0 0.0
    %629 = vmatpush1.msra.mxu0 0.0
    %630 = vmatprep.subr.mxu0 0.0
    %631 = vmatpush1.msra.mxu0 0.0
    %632 = vmatprep.subr.mxu0 0.0
    %633 = vmatpush1.msra.mxu0 0.0
    %634 = vmatprep.subr.mxu0 0.0
    %635 = vmatpush1.msra.mxu0 0.0
    %636 = vmatprep.subr.mxu0 0.0
    %637 = vmatpush1.msra.mxu0 0.0
    %638 = vmatprep.mubr.f32.mxu0 0.0
    %639 = vmatmul.mubr.f32.gmra.mrb[0].mxu0 %v568
    %v640 = vpop.f32.mrb[0].mxu0
    %v641 = vadd.f32 %v564, %v640
    %v642 = vpop.f32.mrb[0].mxu0
    %643 = vdwg.mxu0
    %v644 = vxor.u32 %v641, 2147483648
    %v645 = vmul.f32 %v644, 1.442695
    %v646 = vpow.pop %v645
    %v647 = vadd.f32 %v646, 1.0
    %v648 = vrcp.pop %v647
    %v649 = vmul.f32 1.0, %v648
    %vm650 = vcmask 517120
    %651 = vst.msk [vmem:[#allocation7] sm:$0x3] %vm650, %v649
    // Predicated region
    $region30: #{tpu_custom_call.1} parent=1 // pred_check
      _
    $region31: #{tpu_custom_call.1} parent=1 // pred_check_branch
      %653 = sbr.rel (0) target = $region33
    $region32: #{tpu_custom_call.1} parent=1 // pred_region
      %s655 = ssub.s32 32, 32
      %656 = vsyncadd [#allocation4], %s655
      %s658 = sshll.u32 [#allocation7], 4
      %s659 = int_to_ptr.vmem [resolvable:$true] %s658
      %661 = dma.vmem_to_hbm [thread:$0]  %s659, 32, %s5, [#allocation4]
    $region33: #{tpu_custom_call.1} parent=1 // pred_fallthru
      _
    // Predicated region
    $region34: #{tpu_custom_call.1} parent=1 // pred_check
      _
    $region35: #{tpu_custom_call.1} parent=1 // pred_check_branch
      %663 = sbr.rel (0) target = $region37
    $region36: #{tpu_custom_call.1} parent=1 // pred_region
      %664 = dma.done [#allocation4], 32
    $region37: #{tpu_custom_call.1} parent=1 // pred_fallthru
      _
    %665 = vsyncpa [#allocation3], 1
    %666 = vsyncpa [#allocation6], 1
    %667 = vsyncpa [#allocation4], 1

</llo_original>
